<compile_context>
chip_gen: v6e
topology: v6e:2x2x1
jax: 0.10.0
libtpu: 0.0.40
codegen_flags: <defaults>
</compile_context>

<pallas_src>
import functools

import jax
import jax.numpy as jnp
from jax import lax
from jax.experimental import pallas as pl
from jax.experimental.pallas import tpu as pltpu


# ------------------------------ Pass 1: stats ------------------------------
def _stats_kernel(x_ref, sum_ref, sumsq_ref):
    # x_ref: (1, C, tm) block; sum_ref/sumsq_ref: (1, C, 1) output blocks that
    # stay grid-resident while the spatial axis (grid axis 1) iterates.
    @pl.when(pl.program_id(1) == 0)
    def _():
        sum_ref[...] = jnp.zeros_like(sum_ref)
        sumsq_ref[...] = jnp.zeros_like(sumsq_ref)

    x = x_ref[0].astype(jnp.float32)                             # (C, tm)
    sum_ref[...] += jnp.sum(x, axis=1, keepdims=True)[None]      # per-channel sum
    sumsq_ref[...] += jnp.sum(x * x, axis=1, keepdims=True)[None]


# ---------------------------- Pass 2: normalize ----------------------------
def _norm_kernel(x_ref, scale_ref, shift_ref, o_ref, *, activation,
                 activation_param):
    # x_ref/o_ref: (1, C, tm) blocks; scale_ref/shift_ref: (C, 1) per-channel.
    x = x_ref[0].astype(jnp.float32)                             # (C, tm)
    y = x * scale_ref[...] + shift_ref[...]                      # folded affine
    if activation == "relu":
        y = jnp.maximum(y, 0.0)
    elif activation == "leaky_relu":
        y = jnp.where(y >= 0.0, y, y * activation_param)
    elif activation == "elu":
        y = jnp.where(y >= 0.0, y, activation_param * (jnp.exp(y) - 1.0))
    elif activation == "identity":
        pass
    else:
        raise RuntimeError(f"Unknown activation function {activation}")
    o_ref[0] = y.astype(o_ref.dtype)


# ------------------------------ Tiling helpers ------------------------------
def _vmem_capacity_bytes():
    try:
        return int(pltpu.get_tpu_info().vmem_capacity_bytes)
    except Exception:
        return 64 << 20  # conservative: assume v7x-sized VMEM


def _choose_tm(hw, c, itemsize, target_bytes, min_blocks):
    """Largest lane tile: multiple of 128 dividing hw, ~target_bytes, leaving
    at least `min_blocks` blocks along the lane axis when possible."""
    assert hw % 128 == 0
    cap_bytes = max(128, (target_bytes // max(1, c * itemsize)) // 128 * 128)
    cap_split = hw // min_blocks
    if cap_split < 128:
        cap_split = hw                       # too small to split further
    tm = min(hw, cap_bytes, (cap_split // 128) * 128)
    tm = max(128, (tm // 128) * 128)
    while hw % tm != 0:                      # hw % 128 == 0 -> always terminates
        tm -= 128
    return tm


@functools.partial(jax.jit,
                   static_argnames=("eps", "activation", "activation_param"))
def inplace_abn(x, weight, bias, *, eps=1e-5, activation="leaky_relu",
                activation_param=0.01):
    """Forward pass of InPlaceABN in training mode (batch statistics).

    x: (N, C, H, W) NCHW.  weight, bias: (C,) affine parameters.
    Returns the activated, normalized tensor with the same shape/dtype as x.
    """
    N, C, H, W = x.shape
    HW = H * W
    M = N * HW                                # true per-channel element count
    itemsize = jnp.dtype(x.dtype).itemsize

    x3d = x.reshape(N, C, HW)                 # free contiguous reshape
    pad = (-HW) % 128
    if pad:
        # Zero padding leaves per-channel sum/sumsq unchanged (we divide by the
        # true M); the padded lanes of pass 2 are sliced off at the end.
        x3d = jnp.pad(x3d, ((0, 0), (0, 0), (0, pad)))
    HWp = HW + pad

    # ------- generation-gated tile / VMEM-limit sizing -------
    vmem_cap = _vmem_capacity_bytes()
    if vmem_cap >= (96 << 20):                # v5e / v6e: 128 MiB VMEM
        target_tile_bytes, vmem_limit_cap = 16 << 20, 100 << 20
    else:                                     # v7x: 64 MiB VMEM
        target_tile_bytes, vmem_limit_cap = 10 << 20, 52 << 20

    min_blocks = 2 if N == 1 else 1           # keep pass 2 megacore-splittable
    tm = _choose_tm(HWp, C, itemsize, target_tile_bytes, min_blocks)
    n_m = HWp // tm
    tile_bytes = C * tm * itemsize
    # Pass 2 needs in + out, double-buffered (= 4 tiles) + small constants.
    # TODO(synk): for very large C (a single (C, 128) tile > ~12 MiB) the
    # channel axis should be blocked as well instead of using a full-C tile.
    vmem_limit = int(min(vmem_limit_cap,
                         max(16 << 20, 4 * tile_bytes + (2 << 20))))

    # ------- pass-1 grid: (G groups, B spatial blocks per group) -------
    if N > 1:
        G, B = N, n_m
        x_map_p1 = lambda g, m: (g, 0, m)
    else:
        G = 2 if (n_m >= 2 and n_m % 2 == 0) else 1
        B = n_m // G
        x_map_p1 = lambda g, m: (0, 0, g * B + m)

    sum_p, sumsq_p = pl.pallas_call(
        _stats_kernel,
        out_shape=(jax.ShapeDtypeStruct((G, C, 1), jnp.float32),
                   jax.ShapeDtypeStruct((G, C, 1), jnp.float32)),
        grid_spec=pltpu.PrefetchScalarGridSpec(
            num_scalar_prefetch=0,
            grid=(G, B),
            in_specs=[pl.BlockSpec((1, C, tm), x_map_p1)],
            out_specs=[pl.BlockSpec((1, C, 1), lambda g, m: (g, 0, 0)),
                       pl.BlockSpec((1, C, 1), lambda g, m: (g, 0, 0))]),
        compiler_params=pltpu.CompilerParams(
            dimension_semantics=("parallel", "arbitrary"),
            vmem_limit_bytes=vmem_limit),
        cost_estimate=pl.CostEstimate(
            flops=3 * N * C * HWp,
            transcendentals=0,
            bytes_accessed=N * C * HWp * itemsize + 2 * G * C * 4),
    )(x3d)

    # ------- tiny per-channel fold (C elements of JAX) -------
    # TODO(synk): E[x^2]-E[x]^2 in f32 can lose precision vs PyTorch for very
    # large M / large-|mean| inputs; use Welford-style accumulation if strict
    # parity is required.
    inv_m = 1.0 / float(M)
    sum_c = jnp.sum(sum_p, axis=0)            # (C, 1)
    sumsq_c = jnp.sum(sumsq_p, axis=0)        # (C, 1)
    mean = sum_c * inv_m
    var = jnp.maximum(sumsq_c * inv_m - mean * mean, 0.0)
    inv_std = lax.rsqrt(var + eps)
    w32 = weight.astype(jnp.float32).reshape(C, 1)
    b32 = bias.astype(jnp.float32).reshape(C, 1)
    scale = w32 * inv_std                     # (C, 1)
    shift = b32 - mean * scale                # (C, 1)

    # ------- pass 2: normalize + activation, output aliased to input -------
    norm = functools.partial(_norm_kernel, activation=activation,
                             activation_param=float(activation_param))
    out3d = pl.pallas_call(
        norm,
        out_shape=jax.ShapeDtypeStruct((N, C, HWp), x.dtype),
        grid_spec=pltpu.PrefetchScalarGridSpec(
            num_scalar_prefetch=0,
            grid=(N, n_m),
            in_specs=[pl.BlockSpec((1, C, tm), lambda n, m: (n, 0, m)),
                      pl.BlockSpec((C, 1), lambda n, m: (0, 0)),
                      pl.BlockSpec((C, 1), lambda n, m: (0, 0))],
            out_specs=pl.BlockSpec((1, C, tm), lambda n, m: (n, 0, m))),
        compiler_params=pltpu.CompilerParams(
            dimension_semantics=("parallel", "parallel"),
            vmem_limit_bytes=vmem_limit),
        cost_estimate=pl.CostEstimate(
            flops=4 * N * C * HWp,
            transcendentals=(N * C * HWp if activation == "elu" else 0),
            bytes_accessed=2 * N * C * HWp * itemsize),
        input_output_aliases={0: 0},          # "in-place" ABN
    )(x3d, scale, shift)

    if pad:
        out3d = out3d[:, :, :HW]
    return out3d.reshape(N, C, H, W)


def _reference(x, weight, bias, eps, negative_slope):
    # Pure-JAX reference of functional.batch_norm(training=True) + leaky_relu.
    mean = jnp.mean(x, axis=(0, 2, 3), keepdims=True)
    var = jnp.mean((x - mean) ** 2, axis=(0, 2, 3), keepdims=True)
    y = (x - mean) / jnp.sqrt(var + eps)
    y = y * weight.reshape(1, -1, 1, 1) + bias.reshape(1, -1, 1, 1)
    return jnp.where(y >= 0, y, y * negative_slope)


if __name__ == "__main__":
    key = jax.random.PRNGKey(0)
    N, C, H, W = 2, 4, 16, 16
    kx, kw, kb = jax.random.split(key, 3)
    x = jax.random.normal(kx, (N, C, H, W), dtype=jnp.float32) * 2.0 + 0.5

    # PyTorch reset_parameters: weight=1, bias=0; perturb to exercise affine.
    weight = jnp.ones((C,), jnp.float32) + 0.1 * jax.random.normal(kw, (C,))
    bias = jnp.zeros((C,), jnp.float32) + 0.1 * jax.random.normal(kb, (C,))

    eps = 1e-5
    activation_param = 0.01  # leaky_relu negative slope

    out = inplace_abn(x, weight, bias, eps=eps, activation="leaky_relu",
                      activation_param=activation_param)
    out = jax.block_until_ready(out)

    ref = _reference(x, weight, bias, eps, activation_param)
    assert out.shape == (N, C, H, W)
    err = jnp.max(jnp.abs(out - ref))
    assert jnp.allclose(out, ref, atol=1e-4, rtol=1e-4), f"max err {err}"

    # TODO(synk): running_mean/running_var EMA and num_batches_tracked updates
    # are in-place buffer side effects of the PyTorch module and are not
    # returned by this forward-only kernel.
    print("KERNEL_OK")
</pallas_src>

<mosaic_0001>
module attributes {stable_mosaic.version = 11 : i64} {
  func.func @_stats_kernel(%arg0: i32, %arg1: i32, %arg2: memref<1x4x256xf32, #tpu.memory_space<vmem>>, %arg3: memref<1x4x1xf32, #tpu.memory_space<vmem>>, %arg4: memref<1x4x1xf32, #tpu.memory_space<vmem>>) attributes {dimension_semantics = [#tpu.dimension_semantics<parallel>, #tpu.dimension_semantics<arbitrary>], iteration_bounds = array<i64: 2, 1>, scalar_prefetch = 0 : i64, scratch_operands = 0 : i64, tpu.core_type = #tpu.core_type<tc>, window_params = [{transform_indices = @transform_0, window_bounds = array<i64: 1, 4, 256>}, {transform_indices = @transform_1, window_bounds = array<i64: 1, 4, 1>}, {transform_indices = @transform_2, window_bounds = array<i64: 1, 4, 1>}]} {
    %c0_i32 = arith.constant 0 : i32
    %0 = arith.cmpi eq, %arg1, %c0_i32 : i32
    %1 = arith.extui %0 : i1 to i32
    %c0_i32_0 = arith.constant 0 : i32
    %2 = arith.cmpi ne, %1, %c0_i32_0 : i32
    scf.if %2 {
      %cst_16 = arith.constant 0.000000e+00 : f32
      %18 = vector.broadcast %cst_16 : f32 to vector<1x4x1xf32>
      %c0_17 = arith.constant 0 : index
      %c0_18 = arith.constant 0 : index
      %c0_19 = arith.constant 0 : index
      %19 = vector.load %arg3[%c0_17, %c0_18, %c0_19] : memref<1x4x1xf32, #tpu.memory_space<vmem>>, vector<1x4x1xf32>
      tpu.vector_store %arg3[%c0_17, %c0_18, %c0_19], %18 {strides = array<i32>} : memref<1x4x1xf32, #tpu.memory_space<vmem>>, vector<1x4x1xf32>,
      %cst_20 = arith.constant 0.000000e+00 : f32
      %20 = vector.broadcast %cst_20 : f32 to vector<1x4x1xf32>
      %c0_21 = arith.constant 0 : index
      %c0_22 = arith.constant 0 : index
      %c0_23 = arith.constant 0 : index
      %21 = vector.load %arg4[%c0_21, %c0_22, %c0_23] : memref<1x4x1xf32, #tpu.memory_space<vmem>>, vector<1x4x1xf32>
      tpu.vector_store %arg4[%c0_21, %c0_22, %c0_23], %20 {strides = array<i32>} : memref<1x4x1xf32, #tpu.memory_space<vmem>>, vector<1x4x1xf32>,
    } else {
    }
    %c0 = arith.constant 0 : index
    %c0_1 = arith.constant 0 : index
    %c0_2 = arith.constant 0 : index
    %3 = vector.load %arg2[%c0, %c0_1, %c0_2] : memref<1x4x256xf32, #tpu.memory_space<vmem>>, vector<1x4x256xf32>
    %4 = vector.shape_cast %3 : vector<1x4x256xf32> to vector<4x256xf32>
    %c0_3 = arith.constant 0 : index
    %c0_4 = arith.constant 0 : index
    %c0_5 = arith.constant 0 : index
    %5 = vector.load %arg3[%c0_3, %c0_4, %c0_5] : memref<1x4x1xf32, #tpu.memory_space<vmem>>, vector<1x4x1xf32>
    %cst = arith.constant dense<0.000000e+00> : vector<4xf32>
    %6 = vector.multi_reduction <add>, %4, %cst [1] : vector<4x256xf32> to vector<4xf32>
    %7 = vector.shape_cast %6 : vector<4xf32> to vector<4x1xf32>
    %8 = vector.shape_cast %7 : vector<4x1xf32> to vector<1x4x1xf32>
    %9 = arith.addf %5, %8 : vector<1x4x1xf32>
    %c0_6 = arith.constant 0 : index
    %c0_7 = arith.constant 0 : index
    %c0_8 = arith.constant 0 : index
    %10 = vector.load %arg3[%c0_6, %c0_7, %c0_8] : memref<1x4x1xf32, #tpu.memory_space<vmem>>, vector<1x4x1xf32>
    tpu.vector_store %arg3[%c0_6, %c0_7, %c0_8], %9 {strides = array<i32>} : memref<1x4x1xf32, #tpu.memory_space<vmem>>, vector<1x4x1xf32>,
    %c0_9 = arith.constant 0 : index
    %c0_10 = arith.constant 0 : index
    %c0_11 = arith.constant 0 : index
    %11 = vector.load %arg4[%c0_9, %c0_10, %c0_11] : memref<1x4x1xf32, #tpu.memory_space<vmem>>, vector<1x4x1xf32>
    %12 = arith.mulf %4, %4 : vector<4x256xf32>
    %cst_12 = arith.constant dense<0.000000e+00> : vector<4xf32>
    %13 = vector.multi_reduction <add>, %12, %cst_12 [1] : vector<4x256xf32> to vector<4xf32>
    %14 = vector.shape_cast %13 : vector<4xf32> to vector<4x1xf32>
    %15 = vector.shape_cast %14 : vector<4x1xf32> to vector<1x4x1xf32>
    %16 = arith.addf %11, %15 : vector<1x4x1xf32>
    %c0_13 = arith.constant 0 : index
    %c0_14 = arith.constant 0 : index
    %c0_15 = arith.constant 0 : index
    %17 = vector.load %arg4[%c0_13, %c0_14, %c0_15] : memref<1x4x1xf32, #tpu.memory_space<vmem>>, vector<1x4x1xf32>
    tpu.vector_store %arg4[%c0_13, %c0_14, %c0_15], %16 {strides = array<i32>} : memref<1x4x1xf32, #tpu.memory_space<vmem>>, vector<1x4x1xf32>,
    return
  }
  func.func @transform_0(%arg0: i32, %arg1: i32) -> (i32, i32, i32) {
    %c0_i32 = arith.constant 0 : i32
    %c0_i32_0 = arith.constant 0 : i32
    return %arg0, %c0_i32, %arg1 : i32, i32, i32
  }
  func.func @transform_1(%arg0: i32, %arg1: i32) -> (i32, i32, i32) {
    %c0_i32 = arith.constant 0 : i32
    %c0_i32_0 = arith.constant 0 : i32
    %c0_i32_1 = arith.constant 0 : i32
    return %arg0, %c0_i32, %c0_i32_0 : i32, i32, i32
  }
  func.func @transform_2(%arg0: i32, %arg1: i32) -> (i32, i32, i32) {
    %c0_i32 = arith.constant 0 : i32
    %c0_i32_0 = arith.constant 0 : i32
    %c0_i32_1 = arith.constant 0 : i32
    return %arg0, %c0_i32, %c0_i32_0 : i32, i32, i32
  }
}

module attributes {stable_mosaic.version = 11 : i64} {
  func.func @_norm_kernel(%arg0: i32, %arg1: i32, %arg2: memref<1x4x256xf32, #tpu.memory_space<vmem>>, %arg3: memref<4x1xf32, #tpu.memory_space<vmem>>, %arg4: memref<4x1xf32, #tpu.memory_space<vmem>>, %arg5: memref<1x4x256xf32, #tpu.memory_space<vmem>>) attributes {dimension_semantics = [#tpu.dimension_semantics<parallel>, #tpu.dimension_semantics<parallel>], iteration_bounds = array<i64: 2, 1>, scalar_prefetch = 0 : i64, scratch_operands = 0 : i64, tpu.core_type = #tpu.core_type<tc>, window_params = [{transform_indices = @transform_0, window_bounds = array<i64: 1, 4, 256>}, {pipeline_mode = #tpu.pipeline_mode<synchronous>, transform_indices = @transform_1, window_bounds = array<i64: 4, 1>}, {pipeline_mode = #tpu.pipeline_mode<synchronous>, transform_indices = @transform_2, window_bounds = array<i64: 4, 1>}, {transform_indices = @transform_3, window_bounds = array<i64: 1, 4, 256>}]} {
    %c0 = arith.constant 0 : index
    %c0_0 = arith.constant 0 : index
    %c0_1 = arith.constant 0 : index
    %0 = vector.load %arg2[%c0, %c0_0, %c0_1] : memref<1x4x256xf32, #tpu.memory_space<vmem>>, vector<1x4x256xf32>
    %1 = vector.shape_cast %0 : vector<1x4x256xf32> to vector<4x256xf32>
    %c0_2 = arith.constant 0 : index
    %c0_3 = arith.constant 0 : index
    %2 = vector.load %arg3[%c0_2, %c0_3] : memref<4x1xf32, #tpu.memory_space<vmem>>, vector<4x1xf32>
    %3 = vector.broadcast %2 : vector<4x1xf32> to vector<4x256xf32>
    %4 = arith.mulf %1, %3 : vector<4x256xf32>
    %c0_4 = arith.constant 0 : index
    %c0_5 = arith.constant 0 : index
    %5 = vector.load %arg4[%c0_4, %c0_5] : memref<4x1xf32, #tpu.memory_space<vmem>>, vector<4x1xf32>
    %6 = vector.broadcast %5 : vector<4x1xf32> to vector<4x256xf32>
    %7 = arith.addf %4, %6 : vector<4x256xf32>
    %cst = arith.constant 0.000000e+00 : f32
    %8 = vector.broadcast %cst : f32 to vector<4x256xf32>
    %9 = arith.cmpf oge, %7, %8 : vector<4x256xf32>
    %cst_6 = arith.constant 0.00999999977 : f32
    %10 = vector.broadcast %cst_6 : f32 to vector<4x256xf32>
    %11 = arith.mulf %7, %10 : vector<4x256xf32>
    %12 = arith.select %9, %7, %11 : vector<4x256xi1>, vector<4x256xf32>
    %c0_7 = arith.constant 0 : index
    %c0_8 = arith.constant 0 : index
    %c0_9 = arith.constant 0 : index
    %13 = vector.load %arg5[%c0_7, %c0_8, %c0_9] : memref<1x4x256xf32, #tpu.memory_space<vmem>>, vector<1x4x256xf32>
    %14 = vector.shape_cast %13 : vector<1x4x256xf32> to vector<4x256xf32>
    %15 = vector.shape_cast %12 : vector<4x256xf32> to vector<1x4x256xf32>
    tpu.vector_store %arg5[%c0_7, %c0_8, %c0_9], %15 {strides = array<i32>} : memref<1x4x256xf32, #tpu.memory_space<vmem>>, vector<1x4x256xf32>,
    return
  }
  func.func @transform_0(%arg0: i32, %arg1: i32) -> (i32, i32, i32) {
    %c0_i32 = arith.constant 0 : i32
    %c0_i32_0 = arith.constant 0 : i32
    return %arg0, %c0_i32, %arg1 : i32, i32, i32
  }
  func.func @transform_1(%arg0: i32, %arg1: i32) -> (i32, i32) {
    %c0_i32 = arith.constant 0 : i32
    %c0_i32_0 = arith.constant 0 : i32
    %c0_i32_1 = arith.constant 0 : i32
    return %c0_i32, %c0_i32_0 : i32, i32
  }
  func.func @transform_2(%arg0: i32, %arg1: i32) -> (i32, i32) {
    %c0_i32 = arith.constant 0 : i32
    %c0_i32_0 = arith.constant 0 : i32
    %c0_i32_1 = arith.constant 0 : i32
    return %c0_i32, %c0_i32_0 : i32, i32
  }
  func.func @transform_3(%arg0: i32, %arg1: i32) -> (i32, i32, i32) {
    %c0_i32 = arith.constant 0 : i32
    %c0_i32_0 = arith.constant 0 : i32
    return %arg0, %c0_i32, %arg1 : i32, i32, i32
  }
}

</mosaic_0001>

<llo_original>
// kernel: inplace_abn.2
$region0: #{inplace_abn.2}
  #allocation0 [shape = 'u32[]', space=smem, size = 0x4, offset = 0x4, fixed_abs, tag = 'smem constant byte address 0x4 - core index']
  #allocation1 [shape = 'u32[144,128]{1,0:T(1,128)}', space=vmem, size = 0x12000, scoped, tag = 'internal scratch']
  %s0 = inlined_call_operand.vmem [shape: f32[2,4,256], index: 0, kind: input, shape index: {}]
  %s1 = inlined_call_operand.vmem [shape: f32[2,4,1], index: 1, kind: output, shape index: {0}]
  %s2 = inlined_call_operand.vmem [shape: f32[2,4,1], index: 2, kind: output, shape index: {1}]
  %3 = xla_tuple %s1, %s2
  %s4 = sld [smem:[#allocation0]]
  $region49: #{inplace_abn.2} parent=0
    _
  %s6 = ssub.s32 1, %s4
  %s7 = scalar_select 0, %s6, %s4
  loop: start=0, step=1, limit=4
  $region2: #{inplace_abn.2} parent=0 // loop_pre_header
    _
  $region3: #{inplace_abn.2} parent=0 // loop_header
    %s9 = sphi 0, %s13
    %p10 = scmp.ge.s32.totalorder %s9, 4
    %s16 = sphi 0, %s28
    %s17 = sphi 0, %s24
    %s18 = sphi 0, %s16
    %s19 = sphi 0, %s17
    %s20 = sphi 0, %s18
    %s21 = sphi 0, %s19
    %s33 = sphi 0, %s35
    %s36 = sphi 0, %s33
    %s37 = sphi 0, %s36
    %s53 = sphi 0, %s37
    %s59 = sphi 0, %s61
    %s62 = sphi 0, %s59
    %s63 = sphi 0, %s62
    %s79 = sphi 0, %s63
    %s85 = sphi 0, %s87
    %s88 = sphi 0, %s85
    %s89 = sphi 0, %s88
    %s105 = sphi 0, %s89
  $region4: #{inplace_abn.2} parent=0 // loop_header_branch
    %12 = sbr.rel (%p10) target = $region8
  $region5: #{inplace_abn.2} parent=0 // loop_body
    %s14 = ssub.s32 %s9, 1
    %s15 = ssub.s32 %s9, 2
    %s22 = sadd.s32 1, %s17
    %p23 = scmp.ge.s32.totalorder %s22, 1
    %s24 = scalar_select %p23, 0, %s22
    %s25 = sadd.s32 1, %s16
    %s26 = scalar_select %p23, %s25, %s16
    %p27 = scmp.ge.s32.totalorder %s26, 2
    %s28 = scalar_select %p27, 0, %s26
    %s29 = ssub.s32 %s16, %s28
    %s30 = ssub.s32 %s17, %s24
    %s31 = sor.u32 %s29, %s30
    %p32 = scmp.eq.s32.totalorder %s31, 0
    %s34 = sadd.s32 %s33, 1
    %s35 = scalar_select %p32, %s33, %s34
    %p38 = pneg %p32
    %p39 = scmp.eq.s32.totalorder %s9, 1
    %p40 = por %p38, %p39
    %p41 = scmp.ne.s32.totalorder %s33, %s36
    %p42 = scmp.eq.s32.totalorder %s9, 0
    %p43 = por %p41, %p42
    %p44 = scmp.ne.s32.totalorder %s33, %s36
    %p45 = scmp.eq.s32.totalorder %s14, 1
    %p46 = por %p44, %p45
    %p47 = scmp.ne.s32.totalorder %s36, %s37
    %p48 = scmp.eq.s32.totalorder %s14, 0
    %p49 = por %p47, %p48
    %p50 = scmp.ne.s32.totalorder %s36, %s37
    %p51 = scmp.eq.s32.totalorder %s15, 1
    %p52 = por %p50, %p51
    %p54 = scmp.ne.s32.totalorder %s37, %s53
    %p55 = scmp.eq.s32.totalorder %s15, 0
    %p56 = por %p54, %p55
    %s57 = ssub.s32 %s16, %s28
    %p58 = scmp.eq.s32.totalorder %s57, 0
    %s60 = sadd.s32 %s59, 1
    %s61 = scalar_select %p58, %s59, %s60
    %p64 = pneg %p58
    %p65 = scmp.eq.s32.totalorder %s9, 1
    %p66 = por %p64, %p65
    %p67 = scmp.ne.s32.totalorder %s59, %s62
    %p68 = scmp.eq.s32.totalorder %s9, 0
    %p69 = por %p67, %p68
    %p70 = scmp.ne.s32.totalorder %s59, %s62
    %p71 = scmp.eq.s32.totalorder %s14, 1
    %p72 = por %p70, %p71
    %p73 = scmp.ne.s32.totalorder %s62, %s63
    %p74 = scmp.eq.s32.totalorder %s14, 0
    %p75 = por %p73, %p74
    %p76 = scmp.ne.s32.totalorder %s62, %s63
    %p77 = scmp.eq.s32.totalorder %s15, 1
    %p78 = por %p76, %p77
    %p80 = scmp.ne.s32.totalorder %s63, %s79
    %p81 = scmp.eq.s32.totalorder %s15, 0
    %p82 = por %p80, %p81
    %s83 = ssub.s32 %s16, %s28
    %p84 = scmp.eq.s32.totalorder %s83, 0
    %s86 = sadd.s32 %s85, 1
    %s87 = scalar_select %p84, %s85, %s86
    %p90 = pneg %p84
    %p91 = scmp.eq.s32.totalorder %s9, 1
    %p92 = por %p90, %p91
    %p93 = scmp.ne.s32.totalorder %s85, %s88
    %p94 = scmp.eq.s32.totalorder %s9, 0
    %p95 = por %p93, %p94
    %p96 = scmp.ne.s32.totalorder %s85, %s88
    %p97 = scmp.eq.s32.totalorder %s14, 1
    %p98 = por %p96, %p97
    %p99 = scmp.ne.s32.totalorder %s88, %s89
    %p100 = scmp.eq.s32.totalorder %s14, 0
    %p101 = por %p99, %p100
    %p102 = scmp.ne.s32.totalorder %s88, %s89
    %p103 = scmp.eq.s32.totalorder %s15, 1
    %p104 = por %p102, %p103
    %p106 = scmp.ne.s32.totalorder %s89, %s105
    %p107 = scmp.eq.s32.totalorder %s15, 0
    %p108 = por %p106, %p107
    %p109 = scmp.le.s32.totalorder 1, %s9
    %p110 = scmp.lt.s32.totalorder %s9, 3
    %p111 = pnand %p109, %p110
    %p112 = pneg %p111
    // Predicated region
    $region9: #{inplace_abn.2} parent=5 // pred_check
      _
    $region10: #{inplace_abn.2} parent=5 // pred_check_branch
      %114 = sbr.rel (%p111) target = $region12
    $region11: #{inplace_abn.2} parent=5 // pred_region
      %s115 = ssub.s32 %s9, 1
    $region12: #{inplace_abn.2} parent=5 // pred_fallthru
      _
    %p116 = scmp.lt.s32.totalorder %s9, 2
    // Predicated region
    $region13: #{inplace_abn.2} parent=5 // pred_check
      %p117 = pneg %p116
    $region14: #{inplace_abn.2} parent=5 // pred_check_branch
      %119 = sbr.rel (%p117) target = $region16
    $region15: #{inplace_abn.2} parent=5 // pred_region
      // Predicated region
      $region17: #{inplace_abn.2} parent=15 // pred_check
        %p120 = pneg %p43
      $region18: #{inplace_abn.2} parent=15 // pred_check_branch
        %122 = sbr.rel (%p120) target = $region20
      $region19: #{inplace_abn.2} parent=15 // pred_region
        %s123 = smul.u32 2, %s17
        %p124 = scmp.lt.s32.totalorder %s16, 1
        %s125 = scalar_select %p124, %s16, 1
        %p126 = scmp.lt.s32.totalorder %s123, 1
        %s127 = scalar_select %p126, %s123, 1
        %s128 = smul.addr %s125, 2
        %s129 = sadd.s32 %s127, %s128
        %s130 = smul.addr %s129, 4
        %s131 = scalar_lea.vmem %s0, %s130
        %s132 = smul.u32 2, %s17
      $region20: #{inplace_abn.2} parent=15 // pred_fallthru
        _
    $region16: #{inplace_abn.2} parent=5 // pred_fallthru
      _
    %p133 = scmp.le.s32.totalorder 1, %s9
    %p134 = scmp.lt.s32.totalorder %s9, 3
    %p135 = pnand %p133, %p134
    %p136 = pneg %p135
    // Predicated region
    $region21: #{inplace_abn.2} parent=5 // pred_check
      _
    $region22: #{inplace_abn.2} parent=5 // pred_check_branch
      %138 = sbr.rel (%p135) target = $region24
    $region23: #{inplace_abn.2} parent=5 // pred_region
      %s139 = ssub.s32 %s9, 1
      %s140 = smul.u32 2, %s19
      %p141 = scmp.lt.s32.totalorder %s18, 1
      %s142 = scalar_select %p141, %s18, 1
      %p143 = scmp.lt.s32.totalorder %s140, 1
      %s144 = scalar_select %p143, %s140, 1
      %s145 = smul.addr %s142, 2
      %s146 = sadd.s32 %s144, %s145
      %s147 = smul.addr %s146, 4
      %s148 = scalar_lea.vmem %s0, %s147
      %p149 = pneg %p49
      %p150 = pneg %p46
      %p151 = pneg %p75
      %p152 = pneg %p72
      %p153 = scmp.lt.s32.totalorder %s18, 1
      %s154 = scalar_select %p153, %s18, 1
      %s155 = smul.addr %s154, 4
      %s156 = scalar_lea.vmem %s1, %s155
      %p157 = pneg %p101
      %p158 = pneg %p98
      %p159 = scmp.lt.s32.totalorder %s18, 1
      %s160 = scalar_select %p159, %s18, 1
      %s161 = smul.addr %s160, 4
      %s162 = scalar_lea.vmem %s2, %s161
      %s163 = smul.u32 2, %s19
      %p164 = scmp.lt.s32.totalorder %s18, 1
      %s165 = scalar_select %p164, %s18, 1
      %p166 = scmp.lt.s32.totalorder %s163, 1
      %s167 = scalar_select %p166, %s163, 1
      %s168 = smul.addr %s165, 2
      %s169 = sadd.s32 %s167, %s168
      %s170 = smul.addr %s169, 4
      %s171 = scalar_lea.vmem %s0, %s170
      %s172 = smul.u32 2, %s19
      %p173 = scmp.lt.s32.totalorder %s18, 1
      %s174 = scalar_select %p173, %s18, 1
      %s175 = smul.addr %s174, 4
      %s176 = scalar_lea.vmem %s1, %s175
      %p177 = scmp.lt.s32.totalorder %s18, 1
      %s178 = scalar_select %p177, %s18, 1
      %s179 = smul.addr %s178, 4
      %s180 = scalar_lea.vmem %s2, %s179
      %p181 = scmp.eq.s32.totalorder %s19, 0
      // Predicated region
      $region25: #{inplace_abn.2} parent=23 // pred_check
        %p182 = pneg %p181
      $region26: #{inplace_abn.2} parent=23 // pred_check_branch
        %184 = sbr.rel (%p182) target = $region28
      $region27: #{inplace_abn.2} parent=23 // pred_region
        %vm185 = vcmask 3072
        %186 = vst.msk [vmem:[%s176] sm:$0xf] %vm185, 0.0
        %187 = vst.msk [vmem:[%s180] sm:$0xf] %vm185, 0.0
      $region28: #{inplace_abn.2} parent=23 // pred_fallthru
        _
      %v188 = vld [vmem:[%s171] sm:$0xff]
      %v189 = vld [vmem:[%s176] sm:$0xf]
      %v191 = vcombine.high %v188, %v188
      %vm193 = vcmask 1043456
      %v194 = vsel %vm193, %v188, 0.0
      %v195 = vsel %vm193, %v191, 0.0
      %v196 = vadd.f32 %v194, %v195
      %197 = vadd.xlane.f32.xlu0 %v196
      %v198 = vpop.xlane.xlu0 %197
      %v199 = vadd.f32 %v189, %v198
      %vm200 = vcmask 3072
      %201 = vst.msk [vmem:[%s176] sm:$0xf] %vm200, %v199
      %v202 = vld [vmem:[%s180] sm:$0xf]
      %v203 = vmul.f32 %v188, %v188
      %v205 = vcombine.high %v203, %v203
      %v207 = vsel %vm193, %v203, 0.0
      %v208 = vsel %vm193, %v205, 0.0
      %v209 = vadd.f32 %v207, %v208
      %210 = vadd.xlane.f32.xlu0 %v209
      %v211 = vpop.xlane.xlu0 %210
      %v212 = vadd.f32 %v202, %v211
      %213 = vst.msk [vmem:[%s180] sm:$0xf] %vm200, %v212
      %p214 = scmp.lt.s32.totalorder %s18, 1
      %s215 = scalar_select %p214, %s18, 1
      %s216 = smul.addr %s215, 4
      %s217 = scalar_lea.vmem %s1, %s216
      %p218 = scmp.lt.s32.totalorder %s18, 1
      %s219 = scalar_select %p218, %s18, 1
      %s220 = smul.addr %s219, 4
      %s221 = scalar_lea.vmem %s2, %s220
      // Predicated region
      $region29: #{inplace_abn.2} parent=23 // pred_check
        %p222 = pneg %p72
      $region30: #{inplace_abn.2} parent=23 // pred_check_branch
        %224 = sbr.rel (%p222) target = $region32
      $region31: #{inplace_abn.2} parent=23 // pred_region
        _
      $region32: #{inplace_abn.2} parent=23 // pred_fallthru
        _
      // Predicated region
      $region33: #{inplace_abn.2} parent=23 // pred_check
        %p225 = pneg %p98
      $region34: #{inplace_abn.2} parent=23 // pred_check_branch
        %227 = sbr.rel (%p225) target = $region36
      $region35: #{inplace_abn.2} parent=23 // pred_region
        _
      $region36: #{inplace_abn.2} parent=23 // pred_fallthru
        _
    $region24: #{inplace_abn.2} parent=5 // pred_fallthru
      _
    %p228 = scmp.le.s32.totalorder 2, %s9
    // Predicated region
    $region37: #{inplace_abn.2} parent=5 // pred_check
      %p229 = pneg %p228
    $region38: #{inplace_abn.2} parent=5 // pred_check_branch
      %231 = sbr.rel (%p229) target = $region40
    $region39: #{inplace_abn.2} parent=5 // pred_region
      %s232 = ssub.s32 %s9, 2
      // Predicated region
      $region41: #{inplace_abn.2} parent=39 // pred_check
        %p233 = pneg %p78
      $region42: #{inplace_abn.2} parent=39 // pred_check_branch
        %235 = sbr.rel (%p233) target = $region44
      $region43: #{inplace_abn.2} parent=39 // pred_region
        %p236 = scmp.lt.s32.totalorder %s20, 1
        %s237 = scalar_select %p236, %s20, 1
        %s238 = smul.addr %s237, 4
        %s239 = scalar_lea.vmem %s1, %s238
      $region44: #{inplace_abn.2} parent=39 // pred_fallthru
        _
      // Predicated region
      $region45: #{inplace_abn.2} parent=39 // pred_check
        %p240 = pneg %p104
      $region46: #{inplace_abn.2} parent=39 // pred_check_branch
        %242 = sbr.rel (%p240) target = $region48
      $region47: #{inplace_abn.2} parent=39 // pred_region
        %p243 = scmp.lt.s32.totalorder %s20, 1
        %s244 = scalar_select %p243, %s20, 1
        %s245 = smul.addr %s244, 4
        %s246 = scalar_lea.vmem %s2, %s245
      $region48: #{inplace_abn.2} parent=39 // pred_fallthru
        _
    $region40: #{inplace_abn.2} parent=5 // pred_fallthru
      _
  $region6: #{inplace_abn.2} parent=0 // loop_footer
    %s13 = sadd.s32 1, %s9
  $region7: #{inplace_abn.2} parent=0 // loop_footer_branch
    %8 = sbr.rel target = $region3
  $region8: #{inplace_abn.2} parent=0 // loop_exit
    _

// kernel: inplace_abn.3
$region0: #{inplace_abn.3}
  #allocation0 [shape = 'u32[]', space=smem, size = 0x4, offset = 0x4, fixed_abs, tag = 'smem constant byte address 0x4 - core index']
  #allocation1 [shape = 'u32[144,128]{1,0:T(1,128)}', space=vmem, size = 0x12000, scoped, tag = 'internal scratch']
  %s0 = inlined_call_operand.vmem [shape: f32[2,4,256], index: 0, kind: input, shape index: {}, may-alias: {0,3}]
  %s1 = inlined_call_operand.vmem [shape: f32[4,1], index: 1, kind: input, shape index: {}]
  %s2 = inlined_call_operand.vmem [shape: f32[4,1], index: 2, kind: input, shape index: {}]
  %s3 = inlined_call_operand.vmem [shape: f32[2,4,256], index: 3, kind: output, shape index: {}, may-alias: {0,3}]
  %s4 = sld [smem:[#allocation0]]
  $region45: #{inplace_abn.3} parent=0
    _
  %s6 = ssub.s32 1, %s4
  %s7 = scalar_select 0, %s6, %s4
  loop: start=0, step=1, limit=4
  $region2: #{inplace_abn.3} parent=0 // loop_pre_header
    _
  $region3: #{inplace_abn.3} parent=0 // loop_header
    %s9 = sphi 0, %s13
    %p10 = scmp.ge.s32.totalorder %s9, 4
    %s16 = sphi 0, %s28
    %s17 = sphi 0, %s24
    %s18 = sphi 0, %s16
    %s19 = sphi 0, %s17
    %s20 = sphi 0, %s18
    %s21 = sphi 0, %s19
    %s33 = sphi 0, %s35
    %s36 = sphi 0, %s33
    %s37 = sphi 0, %s36
    %s53 = sphi 0, %s37
    %s57 = sphi 0, %s57
    %s59 = sphi 0, %s57
    %s60 = sphi 0, %s59
    %s74 = sphi 0, %s60
    %s78 = sphi 0, %s78
    %s80 = sphi 0, %s78
    %s81 = sphi 0, %s80
    %s95 = sphi 0, %s81
    %s103 = sphi 0, %s105
    %s106 = sphi 0, %s103
    %s107 = sphi 0, %s106
    %s123 = sphi 0, %s107
  $region4: #{inplace_abn.3} parent=0 // loop_header_branch
    %12 = sbr.rel (%p10) target = $region8
  $region5: #{inplace_abn.3} parent=0 // loop_body
    %s14 = ssub.s32 %s9, 1
    %s15 = ssub.s32 %s9, 2
    %s22 = sadd.s32 1, %s17
    %p23 = scmp.ge.s32.totalorder %s22, 1
    %s24 = scalar_select %p23, 0, %s22
    %s25 = sadd.s32 1, %s16
    %s26 = scalar_select %p23, %s25, %s16
    %p27 = scmp.ge.s32.totalorder %s26, 2
    %s28 = scalar_select %p27, 0, %s26
    %s29 = ssub.s32 %s16, %s28
    %s30 = ssub.s32 %s17, %s24
    %s31 = sor.u32 %s29, %s30
    %p32 = scmp.eq.s32.totalorder %s31, 0
    %s34 = sadd.s32 %s33, 1
    %s35 = scalar_select %p32, %s33, %s34
    %p38 = pneg %p32
    %p39 = scmp.eq.s32.totalorder %s9, 1
    %p40 = por %p38, %p39
    %p41 = scmp.ne.s32.totalorder %s33, %s36
    %p42 = scmp.eq.s32.totalorder %s9, 0
    %p43 = por %p41, %p42
    %p44 = scmp.ne.s32.totalorder %s33, %s36
    %p45 = scmp.eq.s32.totalorder %s14, 1
    %p46 = por %p44, %p45
    %p47 = scmp.ne.s32.totalorder %s36, %s37
    %p48 = scmp.eq.s32.totalorder %s14, 0
    %p49 = por %p47, %p48
    %p50 = scmp.ne.s32.totalorder %s36, %s37
    %p51 = scmp.eq.s32.totalorder %s15, 1
    %p52 = por %p50, %p51
    %p54 = scmp.ne.s32.totalorder %s37, %s53
    %p55 = scmp.eq.s32.totalorder %s15, 0
    %p56 = por %p54, %p55
    %s58 = sadd.s32 %s57, 1
    %p61 = scmp.eq.s32.totalorder %s9, 1
    %p62 = scmp.ne.s32.totalorder %s57, %s59
    %p63 = scmp.eq.s32.totalorder %s9, 0
    %p64 = por %p62, %p63
    %p65 = scmp.ne.s32.totalorder %s57, %s59
    %p66 = scmp.eq.s32.totalorder %s14, 1
    %p67 = por %p65, %p66
    %p68 = scmp.ne.s32.totalorder %s59, %s60
    %p69 = scmp.eq.s32.totalorder %s14, 0
    %p70 = por %p68, %p69
    %p71 = scmp.ne.s32.totalorder %s59, %s60
    %p72 = scmp.eq.s32.totalorder %s15, 1
    %p73 = por %p71, %p72
    %p75 = scmp.ne.s32.totalorder %s60, %s74
    %p76 = scmp.eq.s32.totalorder %s15, 0
    %p77 = por %p75, %p76
    %s79 = sadd.s32 %s78, 1
    %p82 = scmp.eq.s32.totalorder %s9, 1
    %p83 = scmp.ne.s32.totalorder %s78, %s80
    %p84 = scmp.eq.s32.totalorder %s9, 0
    %p85 = por %p83, %p84
    %p86 = scmp.ne.s32.totalorder %s78, %s80
    %p87 = scmp.eq.s32.totalorder %s14, 1
    %p88 = por %p86, %p87
    %p89 = scmp.ne.s32.totalorder %s80, %s81
    %p90 = scmp.eq.s32.totalorder %s14, 0
    %p91 = por %p89, %p90
    %p92 = scmp.ne.s32.totalorder %s80, %s81
    %p93 = scmp.eq.s32.totalorder %s15, 1
    %p94 = por %p92, %p93
    %p96 = scmp.ne.s32.totalorder %s81, %s95
    %p97 = scmp.eq.s32.totalorder %s15, 0
    %p98 = por %p96, %p97
    %s99 = ssub.s32 %s16, %s28
    %s100 = ssub.s32 %s17, %s24
    %s101 = sor.u32 %s99, %s100
    %p102 = scmp.eq.s32.totalorder %s101, 0
    %s104 = sadd.s32 %s103, 1
    %s105 = scalar_select %p102, %s103, %s104
    %p108 = pneg %p102
    %p109 = scmp.eq.s32.totalorder %s9, 1
    %p110 = por %p108, %p109
    %p111 = scmp.ne.s32.totalorder %s103, %s106
    %p112 = scmp.eq.s32.totalorder %s9, 0
    %p113 = por %p111, %p112
    %p114 = scmp.ne.s32.totalorder %s103, %s106
    %p115 = scmp.eq.s32.totalorder %s14, 1
    %p116 = por %p114, %p115
    %p117 = scmp.ne.s32.totalorder %s106, %s107
    %p118 = scmp.eq.s32.totalorder %s14, 0
    %p119 = por %p117, %p118
    %p120 = scmp.ne.s32.totalorder %s106, %s107
    %p121 = scmp.eq.s32.totalorder %s15, 1
    %p122 = por %p120, %p121
    %p124 = scmp.ne.s32.totalorder %s107, %s123
    %p125 = scmp.eq.s32.totalorder %s15, 0
    %p126 = por %p124, %p125
    %p127 = scmp.le.s32.totalorder 1, %s9
    %p128 = scmp.lt.s32.totalorder %s9, 3
    %p129 = pnand %p127, %p128
    %p130 = pneg %p129
    // Predicated region
    $region9: #{inplace_abn.3} parent=5 // pred_check
      _
    $region10: #{inplace_abn.3} parent=5 // pred_check_branch
      %132 = sbr.rel (%p129) target = $region12
    $region11: #{inplace_abn.3} parent=5 // pred_region
      %s133 = ssub.s32 %s9, 1
      // Predicated region
      $region13: #{inplace_abn.3} parent=11 // pred_check
        %p134 = pneg %p70
      $region14: #{inplace_abn.3} parent=11 // pred_check_branch
        %136 = sbr.rel (%p134) target = $region16
      $region15: #{inplace_abn.3} parent=11 // pred_region
        _
      $region16: #{inplace_abn.3} parent=11 // pred_fallthru
        _
      // Predicated region
      $region17: #{inplace_abn.3} parent=11 // pred_check
        %p137 = pneg %p91
      $region18: #{inplace_abn.3} parent=11 // pred_check_branch
        %139 = sbr.rel (%p137) target = $region20
      $region19: #{inplace_abn.3} parent=11 // pred_region
        _
      $region20: #{inplace_abn.3} parent=11 // pred_fallthru
        _
    $region12: #{inplace_abn.3} parent=5 // pred_fallthru
      _
    %p140 = scmp.lt.s32.totalorder %s9, 2
    // Predicated region
    $region21: #{inplace_abn.3} parent=5 // pred_check
      %p141 = pneg %p140
    $region22: #{inplace_abn.3} parent=5 // pred_check_branch
      %143 = sbr.rel (%p141) target = $region24
    $region23: #{inplace_abn.3} parent=5 // pred_region
      // Predicated region
      $region25: #{inplace_abn.3} parent=23 // pred_check
        %p144 = pneg %p43
      $region26: #{inplace_abn.3} parent=23 // pred_check_branch
        %146 = sbr.rel (%p144) target = $region28
      $region27: #{inplace_abn.3} parent=23 // pred_region
        %s147 = smul.u32 2, %s17
        %p148 = scmp.lt.s32.totalorder %s16, 1
        %s149 = scalar_select %p148, %s16, 1
        %p150 = scmp.lt.s32.totalorder %s147, 1
        %s151 = scalar_select %p150, %s147, 1
        %s152 = smul.addr %s149, 2
        %s153 = sadd.s32 %s151, %s152
        %s154 = smul.addr %s153, 4
        %s155 = scalar_lea.vmem %s0, %s154
        %s156 = smul.u32 2, %s17
      $region28: #{inplace_abn.3} parent=23 // pred_fallthru
        _
    $region24: #{inplace_abn.3} parent=5 // pred_fallthru
      _
    %p157 = scmp.le.s32.totalorder 1, %s9
    %p158 = scmp.lt.s32.totalorder %s9, 3
    %p159 = pnand %p157, %p158
    %p160 = pneg %p159
    // Predicated region
    $region29: #{inplace_abn.3} parent=5 // pred_check
      _
    $region30: #{inplace_abn.3} parent=5 // pred_check_branch
      %162 = sbr.rel (%p159) target = $region32
    $region31: #{inplace_abn.3} parent=5 // pred_region
      %s163 = ssub.s32 %s9, 1
      %s164 = smul.u32 2, %s19
      %p165 = scmp.lt.s32.totalorder %s18, 1
      %s166 = scalar_select %p165, %s18, 1
      %p167 = scmp.lt.s32.totalorder %s164, 1
      %s168 = scalar_select %p167, %s164, 1
      %s169 = smul.addr %s166, 2
      %s170 = sadd.s32 %s168, %s169
      %s171 = smul.addr %s170, 4
      %s172 = scalar_lea.vmem %s0, %s171
      %p173 = pneg %p49
      %p174 = pneg %p46
      %p175 = pneg %p70
      %p176 = pneg %p67
      %p177 = pneg %p91
      %p178 = pneg %p88
      %p179 = pneg %p119
      %p180 = pneg %p116
      %s181 = smul.u32 2, %s19
      %p182 = scmp.lt.s32.totalorder %s18, 1
      %s183 = scalar_select %p182, %s18, 1
      %p184 = scmp.lt.s32.totalorder %s181, 1
      %s185 = scalar_select %p184, %s181, 1
      %s186 = smul.addr %s183, 2
      %s187 = sadd.s32 %s185, %s186
      %s188 = smul.addr %s187, 4
      %s189 = scalar_lea.vmem %s3, %s188
      %s190 = smul.u32 2, %s19
      %p191 = scmp.lt.s32.totalorder %s18, 1
      %s192 = scalar_select %p191, %s18, 1
      %p193 = scmp.lt.s32.totalorder %s190, 1
      %s194 = scalar_select %p193, %s190, 1
      %s195 = smul.addr %s192, 2
      %s196 = sadd.s32 %s194, %s195
      %s197 = smul.addr %s196, 4
      %s198 = scalar_lea.vmem %s0, %s197
      %s199 = smul.u32 2, %s19
      %s200 = smul.u32 2, %s19
      %p201 = scmp.lt.s32.totalorder %s18, 1
      %s202 = scalar_select %p201, %s18, 1
      %p203 = scmp.lt.s32.totalorder %s200, 1
      %s204 = scalar_select %p203, %s200, 1
      %s205 = smul.addr %s202, 2
      %s206 = sadd.s32 %s204, %s205
      %s207 = smul.addr %s206, 4
      %s208 = scalar_lea.vmem %s3, %s207
      %s209 = smul.u32 2, %s19
      %v210 = vld [vmem:[%s198] sm:$0xff]
      %v211 = vld [vmem:[%s1] sm:$0xf]
      %213 = vset.pattern.permute.xlu0 0
      %214 = vperm.xlu0 %213, %v211
      %v215 = vpop.permute.xlu0 %214
      %v217 = vunpack.c.l.s4 839922192
      %v218 = vunpack.c.0.s8 %v217
      %v219 = vlaneseq
      %v220 = vshrl.u32 %v219, 7
      %v221 = vsub.s32 %v218, %v220
      %v222 = vrot.slane %v215, %v221
      %v224 = vmul.f32 %v210, %v222
      %v225 = vld [vmem:[%s2] sm:$0xf]
      %227 = vset.pattern.permute.xlu0 0
      %228 = vperm.xlu0 %227, %v225
      %v229 = vpop.permute.xlu0 %228
      %v231 = vunpack.c.l.s4 839922192
      %v232 = vunpack.c.0.s8 %v231
      %v233 = vlaneseq
      %v234 = vshrl.u32 %v233, 7
      %v235 = vsub.s32 %v232, %v234
      %v236 = vrot.slane %v229, %v235
      %v238 = vadd.f32 %v224, %v236
      %vm239 = vcmp.ge.f32.partialorder %v238, 0.0
      %v240 = vmul.f32 %v238, 0.01
      %v241 = vsel %vm239, %v238, %v240
      %242 = vst [vmem:[%s208] sm:$0xff] %v241
      %s243 = smul.u32 2, %s19
      %p244 = scmp.lt.s32.totalorder %s18, 1
      %s245 = scalar_select %p244, %s18, 1
      %p246 = scmp.lt.s32.totalorder %s243, 1
      %s247 = scalar_select %p246, %s243, 1
      %s248 = smul.addr %s245, 2
      %s249 = sadd.s32 %s247, %s248
      %s250 = smul.addr %s249, 4
      %s251 = scalar_lea.vmem %s3, %s250
      // Predicated region
      $region33: #{inplace_abn.3} parent=31 // pred_check
        %p252 = pneg %p116
      $region34: #{inplace_abn.3} parent=31 // pred_check_branch
        %254 = sbr.rel (%p252) target = $region36
      $region35: #{inplace_abn.3} parent=31 // pred_region
        %s255 = smul.u32 2, %s19
      $region36: #{inplace_abn.3} parent=31 // pred_fallthru
        _
    $region32: #{inplace_abn.3} parent=5 // pred_fallthru
      _
    %p256 = scmp.le.s32.totalorder 2, %s9
    // Predicated region
    $region37: #{inplace_abn.3} parent=5 // pred_check
      %p257 = pneg %p256
    $region38: #{inplace_abn.3} parent=5 // pred_check_branch
      %259 = sbr.rel (%p257) target = $region40
    $region39: #{inplace_abn.3} parent=5 // pred_region
      %s260 = ssub.s32 %s9, 2
      // Predicated region
      $region41: #{inplace_abn.3} parent=39 // pred_check
        %p261 = pneg %p122
      $region42: #{inplace_abn.3} parent=39 // pred_check_branch
        %263 = sbr.rel (%p261) target = $region44
      $region43: #{inplace_abn.3} parent=39 // pred_region
        %s264 = smul.u32 2, %s21
        %p265 = scmp.lt.s32.totalorder %s20, 1
        %s266 = scalar_select %p265, %s20, 1
        %p267 = scmp.lt.s32.totalorder %s264, 1
        %s268 = scalar_select %p267, %s264, 1
        %s269 = smul.addr %s266, 2
        %s270 = sadd.s32 %s268, %s269
        %s271 = smul.addr %s270, 4
        %s272 = scalar_lea.vmem %s3, %s271
      $region44: #{inplace_abn.3} parent=39 // pred_fallthru
        _
    $region40: #{inplace_abn.3} parent=5 // pred_fallthru
      _
  $region6: #{inplace_abn.3} parent=0 // loop_footer
    %s13 = sadd.s32 1, %s9
  $region7: #{inplace_abn.3} parent=0 // loop_footer_branch
    %8 = sbr.rel target = $region3
  $region8: #{inplace_abn.3} parent=0 // loop_exit
    _

</llo_original>
